<compile_context>
chip_gen: v5e
topology: v5e:2x2
jax: 0.10.0
libtpu: 0.0.40
codegen_flags: <defaults>
</compile_context>

<pallas_src>
import jax
import jax.numpy as jnp
from jax import lax
from jax.experimental import pallas as pl
from jax.experimental.pallas import tpu as pltpu


def _shifted_neighbors(a, seq_len):
    """Left/right sequence neighbours of a (rows, B*L) slab; zero at seq edges."""
    rows, n = a.shape
    pos = lax.broadcasted_iota(jnp.int32, (rows, n), 1) % seq_len      # per-batch l
    left = jnp.where(pos == 0, 0.0, pltpu.roll(a, 1, axis=1))          # a[:, l-1]
    right = jnp.where(pos == seq_len - 1, 0.0,
                      pltpu.roll(a, n - 1, axis=1))                    # a[:, l+1]
    return left, right


def _cnn_kernel(x_ref, w1_ref, w2_ref, o_ref):
    """Single invocation; the whole problem lives in VMEM.

    x_ref  : (C_in, B*L)      channel-major input, lane index = b*L + l
    w1_ref : (H, 3*C_in + 1)  [W1 | b1], W1[o, k*C_in + c] = w1[o, c, k]
    w2_ref : (H, 3*H + 1)     [W2 | b2], same row ordering with C_in -> H
    o_ref  : (B, H, L)        output in the PyTorch NCL layout
    """
    B, H, L = o_ref.shape
    N = B * L
    ones = jnp.ones((1, N), jnp.float32)            # bias row for the affine trick

    # ---- conv1 + ReLU: in-kernel im2col (XLU rolls) + one MXU matmul ----
    x = x_ref[...]
    xl, xr = _shifted_neighbors(x, L)
    x_unf = jnp.concatenate([xl, x, xr, ones], axis=0)            # (3*C_in+1, N)
    h = jnp.dot(w1_ref[...], x_unf, preferred_element_type=jnp.float32)
    h = jnp.maximum(h, 0.0)                                       # (H, N)

    # ---- conv2 + ReLU: same pattern on the intermediate activation ----
    hl, hr = _shifted_neighbors(h, L)
    h_unf = jnp.concatenate([hl, h, hr, ones], axis=0)            # (3*H+1, N)
    y = jnp.dot(w2_ref[...], h_unf, preferred_element_type=jnp.float32)
    y = jnp.maximum(y, 0.0)                                       # (H, N)

    # ---- split the folded lane axis back into per-batch (H, L) blocks ----
    for b in range(B):                                            # static, B is tiny
        o_ref[b] = y[:, b * L:(b + 1) * L]


@jax.jit
def cnn_feature_extractor(x_ncl, w1, b1, w2, b2):
    """Forward pass matching the PyTorch module.

    x_ncl : (B, C_in, L)  float32
    w1    : (H, C_in, 3)  PyTorch Conv1d weight layout (out, in, k)
    b1    : (H,)
    w2    : (H, H, 3)
    b2    : (H,)
    returns (B, H, L)
    """
    B, C_in, L = x_ncl.shape
    H = w1.shape[0]
    N = B * L

    # Input: (B, C_in, L) -> channel-major with batch folded into the lane dim.
    x_cn = jnp.transpose(x_ncl, (1, 0, 2)).reshape(C_in, N).astype(jnp.float32)

    # Weights: (out, in, k) -> (out, k*in) matching the in-kernel im2col row
    # ordering, with the bias appended as a trailing column (ones row in-kernel).
    w1_aug = jnp.concatenate(
        [jnp.transpose(w1, (0, 2, 1)).reshape(H, 3 * C_in), b1.reshape(H, 1)],
        axis=1).astype(jnp.float32)
    w2_aug = jnp.concatenate(
        [jnp.transpose(w2, (0, 2, 1)).reshape(H, 3 * H), b2.reshape(H, 1)],
        axis=1).astype(jnp.float32)

    return pl.pallas_call(
        _cnn_kernel,
        out_shape=jax.ShapeDtypeStruct((B, H, L), jnp.float32),
        grid=(1,),
        in_specs=[
            pl.BlockSpec((C_in, N), lambda i: (0, 0)),
            pl.BlockSpec((H, 3 * C_in + 1), lambda i: (0, 0)),
            pl.BlockSpec((H, 3 * H + 1), lambda i: (0, 0)),
        ],
        out_specs=pl.BlockSpec((B, H, L), lambda i: (0, 0, 0)),
        compiler_params=pltpu.CompilerParams(
            dimension_semantics=("arbitrary",)),
    )(x_cn, w1_aug, w2_aug)


def _reference_forward(x_ncl, w1, b1, w2, b2):
    """Pure-JAX reference using lax.conv (independent of the kernel math)."""
    dn = ("NCH", "OIH", "NCH")
    y = lax.conv_general_dilated(x_ncl, w1, (1,), [(1, 1)], dimension_numbers=dn)
    y = jnp.maximum(y + b1[None, :, None], 0.0)
    y = lax.conv_general_dilated(y, w2, (1,), [(1, 1)], dimension_numbers=dn)
    return jnp.maximum(y + b2[None, :, None], 0.0)


def _init_conv_params(key, out_ch, in_ch, ksize):
    """Deterministic init mimicking PyTorch Conv1d defaults (uniform +-1/sqrt(fan_in))."""
    kw, kb = jax.random.split(key)
    fan_in = in_ch * ksize
    bound = 1.0 / jnp.sqrt(fan_in)
    w = jax.random.uniform(kw, (out_ch, in_ch, ksize), jnp.float32, -bound, bound)
    b = jax.random.uniform(kb, (out_ch,), jnp.float32, -bound, bound)
    return w, b


if __name__ == "__main__":
    batch = 2
    input_channels = 4
    hidden_units = 32
    seq_len = 16

    root = jax.random.PRNGKey(0)
    kx, k1, k2 = jax.random.split(root, 3)

    x = jax.random.normal(kx, (batch, input_channels, seq_len), jnp.float32)
    w1, b1 = _init_conv_params(k1, hidden_units, input_channels, 3)
    w2, b2 = _init_conv_params(k2, hidden_units, hidden_units, 3)

    out = cnn_feature_extractor(x, w1, b1, w2, b2)
    out = jax.block_until_ready(out)

    ref = _reference_forward(x, w1, b1, w2, b2)
    assert out.shape == (batch, hidden_units, seq_len)
    assert jnp.allclose(out, ref, atol=1e-4, rtol=1e-4), "mismatch vs reference"

    print("KERNEL_OK")
</pallas_src>

<mosaic_0001>
module attributes {stable_mosaic.version = 11 : i64} {
  func.func @_cnn_kernel(%arg0: i32, %arg1: memref<4x32xf32, #tpu.memory_space<vmem>>, %arg2: memref<32x13xf32, #tpu.memory_space<vmem>>, %arg3: memref<32x97xf32, #tpu.memory_space<vmem>>, %arg4: memref<2x32x16xf32, #tpu.memory_space<vmem>>) attributes {dimension_semantics = [#tpu.dimension_semantics<arbitrary>], iteration_bounds = array<i64: 1>, scalar_prefetch = 0 : i64, scratch_operands = 0 : i64, tpu.core_type = #tpu.core_type<tc>, window_params = [{pipeline_mode = #tpu.pipeline_mode<synchronous>, transform_indices = @transform_0, window_bounds = array<i64: 4, 32>}, {pipeline_mode = #tpu.pipeline_mode<synchronous>, transform_indices = @transform_1, window_bounds = array<i64: 32, 13>}, {pipeline_mode = #tpu.pipeline_mode<synchronous>, transform_indices = @transform_2, window_bounds = array<i64: 32, 97>}, {pipeline_mode = #tpu.pipeline_mode<synchronous>, transform_indices = @transform_3, window_bounds = array<i64: 2, 32, 16>}]} {
    %cst = arith.constant 1.000000e+00 : f32
    %0 = vector.broadcast %cst : f32 to vector<1x32xf32>
    %c0 = arith.constant 0 : index
    %c0_0 = arith.constant 0 : index
    %1 = vector.load %arg1[%c0, %c0_0] : memref<4x32xf32, #tpu.memory_space<vmem>>, vector<4x32xf32>
    %2 = tpu.iota {dimensions = array<i32: 1>} : vector<4x32xi32>
    %c16_i32 = arith.constant 16 : i32
    %c0_i32 = arith.constant 0 : i32
    %3 = arith.cmpi eq, %c16_i32, %c0_i32 : i32
    %c1_i32 = arith.constant 1 : i32
    %4 = arith.select %3, %c1_i32, %c16_i32 : i32
    %5 = vector.broadcast %4 : i32 to vector<4x32xi32>
    %6 = arith.remsi %2, %5 : vector<4x32xi32>
    %c0_i32_1 = arith.constant 0 : i32
    %7 = vector.broadcast %c0_i32_1 : i32 to vector<4x32xi32>
    %8 = arith.cmpi ne, %6, %7 : vector<4x32xi32>
    %c0_i32_2 = arith.constant 0 : i32
    %9 = vector.broadcast %c0_i32_2 : i32 to vector<4x32xi32>
    %10 = arith.cmpi slt, %6, %9 : vector<4x32xi32>
    %c0_i32_3 = arith.constant 0 : i32
    %11 = arith.cmpi slt, %4, %c0_i32_3 : i32
    %12 = vector.broadcast %11 : i1 to vector<4x32xi1>
    %13 = vector.broadcast %12 : vector<4x32xi1> to vector<4x32xi1>
    %14 = arith.xori %10, %13 : vector<4x32xi1>
    %15 = arith.andi %14, %8 : vector<4x32xi1>
    %16 = vector.broadcast %4 : i32 to vector<4x32xi32>
    %17 = arith.addi %6, %16 : vector<4x32xi32>
    %18 = arith.select %15, %17, %6 : vector<4x32xi1>, vector<4x32xi32>
    %c0_i32_4 = arith.constant 0 : i32
    %19 = vector.broadcast %c0_i32_4 : i32 to vector<4x32xi32>
    %20 = arith.cmpi eq, %18, %19 : vector<4x32xi32>
    %c1_i32_5 = arith.constant 1 : i32
    %21 = tpu.dynamic_rotate %1 by %c1_i32_5 dim 1 : vector<4x32xf32>, i32 -> vector<4x32xf32>
    %cst_6 = arith.constant 0.000000e+00 : f32
    %22 = vector.broadcast %cst_6 : f32 to vector<4x32xf32>
    %23 = arith.select %20, %22, %21 : vector<4x32xi1>, vector<4x32xf32>
    %c15_i32 = arith.constant 15 : i32
    %24 = vector.broadcast %c15_i32 : i32 to vector<4x32xi32>
    %25 = arith.cmpi eq, %18, %24 : vector<4x32xi32>
    %c31_i32 = arith.constant 31 : i32
    %26 = tpu.dynamic_rotate %1 by %c31_i32 dim 1 : vector<4x32xf32>, i32 -> vector<4x32xf32>
    %cst_7 = arith.constant 0.000000e+00 : f32
    %27 = vector.broadcast %cst_7 : f32 to vector<4x32xf32>
    %28 = arith.select %25, %27, %26 : vector<4x32xi1>, vector<4x32xf32>
    %29 = tpu.concatenate %23, %1, %28, %0 in 0 : vector<4x32xf32>, vector<4x32xf32>, vector<4x32xf32>, vector<1x32xf32> -> vector<13x32xf32>
    %c0_8 = arith.constant 0 : index
    %c0_9 = arith.constant 0 : index
    %30 = vector.load %arg2[%c0_8, %c0_9] : memref<32x13xf32, #tpu.memory_space<vmem>>, vector<32x13xf32>
    %cst_10 = arith.constant dense<0.000000e+00> : vector<32x32xf32>
    %31 = tpu.matmul %30, %29, %cst_10 {dimension_numbers = #tpu.dot_dimension_numbers<[1], [0], [0], [1], [0, 0, 1, 1], [], []>} : vector<32x13xf32>, vector<13x32xf32>, vector<32x32xf32> -> vector<32x32xf32>
    %cst_11 = arith.constant 0.000000e+00 : f32
    %32 = vector.broadcast %cst_11 : f32 to vector<32x32xf32>
    %33 = arith.maximumf %31, %32 : vector<32x32xf32>
    %34 = tpu.iota {dimensions = array<i32: 1>} : vector<32x32xi32>
    %c16_i32_12 = arith.constant 16 : i32
    %c0_i32_13 = arith.constant 0 : i32
    %35 = arith.cmpi eq, %c16_i32_12, %c0_i32_13 : i32
    %c1_i32_14 = arith.constant 1 : i32
    %36 = arith.select %35, %c1_i32_14, %c16_i32_12 : i32
    %37 = vector.broadcast %36 : i32 to vector<32x32xi32>
    %38 = arith.remsi %34, %37 : vector<32x32xi32>
    %c0_i32_15 = arith.constant 0 : i32
    %39 = vector.broadcast %c0_i32_15 : i32 to vector<32x32xi32>
    %40 = arith.cmpi ne, %38, %39 : vector<32x32xi32>
    %c0_i32_16 = arith.constant 0 : i32
    %41 = vector.broadcast %c0_i32_16 : i32 to vector<32x32xi32>
    %42 = arith.cmpi slt, %38, %41 : vector<32x32xi32>
    %c0_i32_17 = arith.constant 0 : i32
    %43 = arith.cmpi slt, %36, %c0_i32_17 : i32
    %44 = vector.broadcast %43 : i1 to vector<32x32xi1>
    %45 = vector.broadcast %44 : vector<32x32xi1> to vector<32x32xi1>
    %46 = arith.xori %42, %45 : vector<32x32xi1>
    %47 = arith.andi %46, %40 : vector<32x32xi1>
    %48 = vector.broadcast %36 : i32 to vector<32x32xi32>
    %49 = arith.addi %38, %48 : vector<32x32xi32>
    %50 = arith.select %47, %49, %38 : vector<32x32xi1>, vector<32x32xi32>
    %c0_i32_18 = arith.constant 0 : i32
    %51 = vector.broadcast %c0_i32_18 : i32 to vector<32x32xi32>
    %52 = arith.cmpi eq, %50, %51 : vector<32x32xi32>
    %c1_i32_19 = arith.constant 1 : i32
    %53 = tpu.dynamic_rotate %33 by %c1_i32_19 dim 1 : vector<32x32xf32>, i32 -> vector<32x32xf32>
    %cst_20 = arith.constant 0.000000e+00 : f32
    %54 = vector.broadcast %cst_20 : f32 to vector<32x32xf32>
    %55 = arith.select %52, %54, %53 : vector<32x32xi1>, vector<32x32xf32>
    %c15_i32_21 = arith.constant 15 : i32
    %56 = vector.broadcast %c15_i32_21 : i32 to vector<32x32xi32>
    %57 = arith.cmpi eq, %50, %56 : vector<32x32xi32>
    %c31_i32_22 = arith.constant 31 : i32
    %58 = tpu.dynamic_rotate %33 by %c31_i32_22 dim 1 : vector<32x32xf32>, i32 -> vector<32x32xf32>
    %cst_23 = arith.constant 0.000000e+00 : f32
    %59 = vector.broadcast %cst_23 : f32 to vector<32x32xf32>
    %60 = arith.select %57, %59, %58 : vector<32x32xi1>, vector<32x32xf32>
    %61 = tpu.concatenate %55, %33, %60, %0 in 0 : vector<32x32xf32>, vector<32x32xf32>, vector<32x32xf32>, vector<1x32xf32> -> vector<97x32xf32>
    %c0_24 = arith.constant 0 : index
    %c0_25 = arith.constant 0 : index
    %62 = vector.load %arg3[%c0_24, %c0_25] : memref<32x97xf32, #tpu.memory_space<vmem>>, vector<32x97xf32>
    %cst_26 = arith.constant dense<0.000000e+00> : vector<32x32xf32>
    %63 = tpu.matmul %62, %61, %cst_26 {dimension_numbers = #tpu.dot_dimension_numbers<[1], [0], [0], [1], [0, 0, 1, 1], [], []>} : vector<32x97xf32>, vector<97x32xf32>, vector<32x32xf32> -> vector<32x32xf32>
    %cst_27 = arith.constant 0.000000e+00 : f32
    %64 = vector.broadcast %cst_27 : f32 to vector<32x32xf32>
    %65 = arith.maximumf %63, %64 : vector<32x32xf32>
    %66 = vector.extract_strided_slice %65 {offsets = [0, 0], sizes = [32, 16], strides = [1, 1]} : vector<32x32xf32> to vector<32x16xf32>
    %c0_28 = arith.constant 0 : index
    %c0_29 = arith.constant 0 : index
    %c0_30 = arith.constant 0 : index
    %67 = vector.load %arg4[%c0_28, %c0_29, %c0_30] : memref<2x32x16xf32, #tpu.memory_space<vmem>>, vector<1x32x16xf32>
    %68 = vector.shape_cast %67 : vector<1x32x16xf32> to vector<32x16xf32>
    %69 = vector.shape_cast %66 : vector<32x16xf32> to vector<1x32x16xf32>
    tpu.vector_store %arg4[%c0_28, %c0_29, %c0_30], %69 {strides = array<i32>} : memref<2x32x16xf32, #tpu.memory_space<vmem>>, vector<1x32x16xf32>,
    %70 = vector.extract_strided_slice %65 {offsets = [0, 16], sizes = [32, 16], strides = [1, 1]} : vector<32x32xf32> to vector<32x16xf32>
    %c1 = arith.constant 1 : index
    %c0_31 = arith.constant 0 : index
    %c0_32 = arith.constant 0 : index
    %71 = vector.load %arg4[%c1, %c0_31, %c0_32] : memref<2x32x16xf32, #tpu.memory_space<vmem>>, vector<1x32x16xf32>
    %72 = vector.shape_cast %71 : vector<1x32x16xf32> to vector<32x16xf32>
    %73 = vector.shape_cast %70 : vector<32x16xf32> to vector<1x32x16xf32>
    tpu.vector_store %arg4[%c1, %c0_31, %c0_32], %73 {strides = array<i32>} : memref<2x32x16xf32, #tpu.memory_space<vmem>>, vector<1x32x16xf32>,
    return
  }
  func.func @transform_0(%arg0: i32) -> (i32, i32) {
    %c0_i32 = arith.constant 0 : i32
    %c0_i32_0 = arith.constant 0 : i32
    %c0_i32_1 = arith.constant 0 : i32
    return %c0_i32, %c0_i32_0 : i32, i32
  }
  func.func @transform_1(%arg0: i32) -> (i32, i32) {
    %c0_i32 = arith.constant 0 : i32
    %c0_i32_0 = arith.constant 0 : i32
    %c0_i32_1 = arith.constant 0 : i32
    return %c0_i32, %c0_i32_0 : i32, i32
  }
  func.func @transform_2(%arg0: i32) -> (i32, i32) {
    %c0_i32 = arith.constant 0 : i32
    %c0_i32_0 = arith.constant 0 : i32
    %c0_i32_1 = arith.constant 0 : i32
    return %c0_i32, %c0_i32_0 : i32, i32
  }
  func.func @transform_3(%arg0: i32) -> (i32, i32, i32) {
    %c0_i32 = arith.constant 0 : i32
    %c0_i32_0 = arith.constant 0 : i32
    %c0_i32_1 = arith.constant 0 : i32
    %c0_i32_2 = arith.constant 0 : i32
    return %c0_i32, %c0_i32_0, %c0_i32_1 : i32, i32, i32
  }
}

</mosaic_0001>

<llo_original>
// kernel: cnn_feature_extractor.1
$region0: #{cnn_feature_extractor.1}
  #allocation0 [shape = 'u32[]', space=smem, size = 0x4, offset = 0x4, fixed_abs, tag = 'smem constant byte address 0x4 - core index']
  #allocation1 [shape = 'u32[72,128]{1,0:T(1,128)}', space=vmem, size = 0x9000, scoped, tag = 'internal scratch']
  %s0 = inlined_call_operand.vmem [shape: f32[4,32], index: 0, kind: input, shape index: {}]
  %s1 = inlined_call_operand.vmem [shape: f32[32,13], index: 1, kind: input, shape index: {}]
  %s2 = inlined_call_operand.vmem [shape: f32[32,97], index: 2, kind: input, shape index: {}]
  %s3 = inlined_call_operand.vmem [shape: f32[2,32,16], index: 3, kind: output, shape index: {}]
  %s4 = sld [smem:[#allocation0]]
  $region22: #{cnn_feature_extractor.1} parent=0
    _
  %s6 = ssub.s32 1, %s4
  %s7 = scalar_select 0, %s6, %s4
  // Predicated region
  $region2: #{cnn_feature_extractor.1} parent=0 // pred_check
    _
  $region3: #{cnn_feature_extractor.1} parent=0 // pred_check_branch
    %9 = sbr.rel (0) target = $region5
  $region4: #{cnn_feature_extractor.1} parent=0 // pred_region
    _
  $region5: #{cnn_feature_extractor.1} parent=0 // pred_fallthru
    _
  // Predicated region
  $region6: #{cnn_feature_extractor.1} parent=0 // pred_check
    _
  $region7: #{cnn_feature_extractor.1} parent=0 // pred_check_branch
    %11 = sbr.rel (0) target = $region9
  $region8: #{cnn_feature_extractor.1} parent=0 // pred_region
    _
  $region9: #{cnn_feature_extractor.1} parent=0 // pred_fallthru
    _
  // Predicated region
  $region10: #{cnn_feature_extractor.1} parent=0 // pred_check
    _
  $region11: #{cnn_feature_extractor.1} parent=0 // pred_check_branch
    %13 = sbr.rel (0) target = $region13
  $region12: #{cnn_feature_extractor.1} parent=0 // pred_region
    _
  $region13: #{cnn_feature_extractor.1} parent=0 // pred_fallthru
    _
  %v14 = vld [vmem:[%s0] sm:$0xf]
  %v15 = vlaneseq
  %v16 = vand.u32 %v15, 127
  %vm17 = vcmp.lt.s32.totalorder %v16, 0
  %v18 = vsub.s32 0, %v16
  %v19 = vsel %vm17, %v18, %v16
  %v20 = vshrl.u32 %v19, 4
  %v21 = vand.u32 %v19, 15
  %v22 = vsub.s32 0, %v21
  %v23 = vsel %vm17, %v22, %v21
  %vm24 = vcmp.ne.s32.totalorder %v23, 0
  %vm25 = vcmp.lt.s32.totalorder %v23, 0
  %vm26 = vmand %vm25, %vm24
  %v27 = vadd.s32 %v23, 16
  %v28 = vsel %vm26, %v27, %v23
  %vm29 = vcmp.eq.s32.totalorder %v28, 0
  %vm30 = vcmask 1047808
  %31 = vrot.lane.b32.xlu0 %v14, 32
  %v32 = vpop.permute.xlu0 %31
  %v33 = vsel %vm30, %v32, %v14
  %34 = vrot.lane.b32.xlu0 %v33, 32
  %v35 = vpop.permute.xlu0 %34
  %v36 = vsel %vm30, %v35, %v14
  %38 = vrot.lane.b32.xlu0 %v36, 97
  %v39 = vpop.permute.xlu0 %38
  %v41 = vsel %vm29, 0.0, %v39
  %vm42 = vcmp.eq.s32.totalorder %v28, 15
  %43 = vrot.lane.b32.xlu0 %v36, 127
  %v44 = vpop.permute.xlu0 %43
  %v46 = vsel %vm42, 0.0, %v44
  %v48 = vrot.slane %v14, 4
  %vm50 = vcmask 1043456
  %v51 = vsel %vm50, %v41, %v48
  %v52 = vsel %vm50, %v46, 1.0
  %v53 = vld [vmem:[%s1] sm:$0xff]
  %v54 = vld [vmem:[%s1 + $0x8] sm:$0xff]
  %v55 = vld [vmem:[%s1 + $0x10] sm:$0xff]
  %v56 = vld [vmem:[%s1 + $0x18] sm:$0xff]
  %vm57 = vcmask 105472
  %v59 = vsel %vm57, %v53, 0
  %v62 = vsel %vm57, %v54, 0
  %v65 = vsel %vm57, %v55, 0
  %v68 = vsel %vm57, %v56, 0
  %vm70 = vcmask 1044480
  %v72 = vsel %vm70, %v52, 0
  %74 = vmatpush.msra.mxu0 0.0
  %75 = vmatpush.msra.mxu0 0.0
  %76 = vmatpush.msra.mxu0 0.0
  %77 = vmatpush.msra.mxu0 0.0
  %78 = vmatpush.msra.mxu0 0.0
  %79 = vmatpush.msra.mxu0 0.0
  %80 = vmatpush.msra.mxu0 0.0
  %81 = vmatpush.msra.mxu0 0.0
  %82 = vmatpush.msra.mxu0 0.0
  %83 = vmatpush.msra.mxu0 0.0
  %84 = vmatpush.msra.mxu0 0.0
  %85 = vmatpush.msra.mxu0 0.0
  %86 = vmatpush.msra.mxu0 0.0
  %87 = vmatpush.msra.mxu0 0.0
  %88 = vmatpush.msra.mxu0 %v72
  %89 = vmatpush.msra.mxu0 %v51
  %90 = vmatmul.f32.gmra.mxu0 %v59
  %v91 = vpop.f32.mrf.mxu0
  %v92 = vadd.f32 0.0, %v91
  %93 = vmatmul.f32.gmra.mxu0 %v62
  %v94 = vpop.f32.mrf.mxu0
  %v95 = vadd.f32 0.0, %v94
  %96 = vmatmul.f32.gmra.mxu0 %v65
  %v97 = vpop.f32.mrf.mxu0
  %v98 = vadd.f32 0.0, %v97
  %99 = vmatmul.f32.gmra.mxu0 %v68
  %v100 = vpop.f32.mrf.mxu0
  %v101 = vadd.f32 0.0, %v100
  %102 = vdwg.mxu0
  %v103 = vmax.f32 %v92, 0.0
  %v104 = vmax.f32 %v95, 0.0
  %v105 = vmax.f32 %v98, 0.0
  %v106 = vmax.f32 %v101, 0.0
  %107 = vrot.lane.b32.xlu0 %v103, 32
  %v108 = vpop.permute.xlu0 %107
  %v109 = vsel %vm30, %v108, %v103
  %110 = vrot.lane.b32.xlu0 %v104, 32
  %v111 = vpop.permute.xlu0 %110
  %v112 = vsel %vm30, %v111, %v104
  %113 = vrot.lane.b32.xlu0 %v105, 32
  %v114 = vpop.permute.xlu0 %113
  %v115 = vsel %vm30, %v114, %v105
  %116 = vrot.lane.b32.xlu0 %v106, 32
  %v117 = vpop.permute.xlu0 %116
  %v118 = vsel %vm30, %v117, %v106
  %119 = vrot.lane.b32.xlu0 %v109, 32
  %v120 = vpop.permute.xlu0 %119
  %121 = vrot.lane.b32.xlu0 %v112, 32
  %v122 = vpop.permute.xlu0 %121
  %123 = vrot.lane.b32.xlu0 %v115, 32
  %v124 = vpop.permute.xlu0 %123
  %125 = vrot.lane.b32.xlu0 %v118, 32
  %v126 = vpop.permute.xlu0 %125
  %v127 = vsel %vm30, %v120, %v103
  %v128 = vsel %vm30, %v122, %v104
  %v129 = vsel %vm30, %v124, %v105
  %v130 = vsel %vm30, %v126, %v106
  %135 = vrot.lane.b32.xlu0 %v127, 97
  %v136 = vpop.permute.xlu0 %135
  %137 = vrot.lane.b32.xlu0 %v128, 97
  %v138 = vpop.permute.xlu0 %137
  %139 = vrot.lane.b32.xlu0 %v129, 97
  %v140 = vpop.permute.xlu0 %139
  %141 = vrot.lane.b32.xlu0 %v130, 97
  %v142 = vpop.permute.xlu0 %141
  %v147 = vsel %vm29, 0.0, %v136
  %v148 = vsel %vm29, 0.0, %v138
  %v149 = vsel %vm29, 0.0, %v140
  %v150 = vsel %vm29, 0.0, %v142
  %151 = vrot.lane.b32.xlu0 %v127, 127
  %v152 = vpop.permute.xlu0 %151
  %153 = vrot.lane.b32.xlu0 %v128, 127
  %v154 = vpop.permute.xlu0 %153
  %155 = vrot.lane.b32.xlu0 %v129, 127
  %v156 = vpop.permute.xlu0 %155
  %157 = vrot.lane.b32.xlu0 %v130, 127
  %v158 = vpop.permute.xlu0 %157
  %v163 = vsel %vm42, 0.0, %v152
  %v164 = vsel %vm42, 0.0, %v154
  %v165 = vsel %vm42, 0.0, %v156
  %v166 = vsel %vm42, 0.0, %v158
  %v167 = vld [vmem:[%s2] sm:$0xff]
  %v168 = vld [vmem:[%s2 + $0x8] sm:$0xff]
  %v169 = vld [vmem:[%s2 + $0x10] sm:$0xff]
  %v170 = vld [vmem:[%s2 + $0x18] sm:$0xff]
  %vm171 = vcmask 793600
  %v173 = vsel %vm171, %v167, 0
  %v176 = vsel %vm171, %v168, 0
  %v179 = vsel %vm171, %v169, 0
  %v182 = vsel %vm171, %v170, 0
  %vm184 = vcmask 1040384
  %v186 = vsel %vm184, 1.0, 0
  %188 = vmatpush.msra.mxu0 0.0
  %189 = vmatpush.msra.mxu0 0.0
  %190 = vmatpush.msra.mxu0 0.0
  %191 = vmatpush.msra.mxu0 %v186
  %192 = vmatpush.msra.mxu0 %v166
  %193 = vmatpush.msra.mxu0 %v165
  %194 = vmatpush.msra.mxu0 %v164
  %195 = vmatpush.msra.mxu0 %v163
  %196 = vmatpush.msra.mxu0 %v106
  %197 = vmatpush.msra.mxu0 %v105
  %198 = vmatpush.msra.mxu0 %v104
  %199 = vmatpush.msra.mxu0 %v103
  %200 = vmatpush.msra.mxu0 %v150
  %201 = vmatpush.msra.mxu0 %v149
  %202 = vmatpush.msra.mxu0 %v148
  %203 = vmatpush.msra.mxu0 %v147
  %204 = vmatmul.f32.gmra.mxu0 %v173
  %v205 = vpop.f32.mrf.mxu0
  %v206 = vadd.f32 0.0, %v205
  %207 = vmatmul.f32.gmra.mxu0 %v176
  %v208 = vpop.f32.mrf.mxu0
  %v209 = vadd.f32 0.0, %v208
  %210 = vmatmul.f32.gmra.mxu0 %v179
  %v211 = vpop.f32.mrf.mxu0
  %v212 = vadd.f32 0.0, %v211
  %213 = vmatmul.f32.gmra.mxu0 %v182
  %v214 = vpop.f32.mrf.mxu0
  %v215 = vadd.f32 0.0, %v214
  %216 = vdwg.mxu0
  %v217 = vmax.f32 %v206, 0.0
  %v218 = vmax.f32 %v209, 0.0
  %v219 = vmax.f32 %v212, 0.0
  %v220 = vmax.f32 %v215, 0.0
  %vm221 = vcmask 130048
  %222 = vst.msk [vmem:[%s3] sm:$0xff] %vm221, %v217
  %223 = vst.msk [vmem:[%s3 + $0x8] sm:$0xff] %vm221, %v218
  %224 = vst.msk [vmem:[%s3 + $0x10] sm:$0xff] %vm221, %v219
  %225 = vst.msk [vmem:[%s3 + $0x18] sm:$0xff] %vm221, %v220
  %230 = vrot.lane.b32.xlu0 %v217, 112
  %v231 = vpop.permute.xlu0 %230
  %232 = vrot.lane.b32.xlu0 %v218, 112
  %v233 = vpop.permute.xlu0 %232
  %234 = vrot.lane.b32.xlu0 %v219, 112
  %v235 = vpop.permute.xlu0 %234
  %236 = vrot.lane.b32.xlu0 %v220, 112
  %v237 = vpop.permute.xlu0 %236
  %s242 = scalar_lea.vmem %s3, 32
  %243 = vst.msk [vmem:[%s242] sm:$0xff] %vm221, %v231
  %244 = vst.msk [vmem:[%s242 + $0x8] sm:$0xff] %vm221, %v233
  %245 = vst.msk [vmem:[%s242 + $0x10] sm:$0xff] %vm221, %v235
  %246 = vst.msk [vmem:[%s242 + $0x18] sm:$0xff] %vm221, %v237
  // Predicated region
  $region14: #{cnn_feature_extractor.1} parent=0 // pred_check
    _
  $region15: #{cnn_feature_extractor.1} parent=0 // pred_check_branch
    %248 = sbr.rel (0) target = $region17
  $region16: #{cnn_feature_extractor.1} parent=0 // pred_region
    _
  $region17: #{cnn_feature_extractor.1} parent=0 // pred_fallthru
    _
  // Predicated region
  $region18: #{cnn_feature_extractor.1} parent=0 // pred_check
    _
  $region19: #{cnn_feature_extractor.1} parent=0 // pred_check_branch
    %250 = sbr.rel (0) target = $region21
  $region20: #{cnn_feature_extractor.1} parent=0 // pred_region
    _
  $region21: #{cnn_feature_extractor.1} parent=0 // pred_fallthru
    _

</llo_original>
